<compile_context>
chip_gen: v5e
topology: v5e:2x2
jax: 0.10.0
libtpu: 0.0.40
codegen_flags: <defaults>
</compile_context>

<pallas_src>
import functools

import jax
import jax.numpy as jnp
from jax.experimental import pallas as pl
from jax.experimental.pallas import tpu as pltpu


# ----------------------------------------------------------------------------
# Fused kernel: projections (all heads) + attention + concat + proj + LN,
# one grid step per batch element.
# ----------------------------------------------------------------------------
def _fused_mha_kernel(q_ref, x_ref, wq_ref, wk_ref, wv_ref, wp_ref, bp_ref,
                      g_ref, b_ref, out_ref, attn_ref, *, num_heads, eps):
    H = num_heads
    q = q_ref[0]                       # (Tq, U) f32
    x = x_ref[0]                       # (Tk, U) f32
    Tq, U = q.shape
    D = U // H

    # Stacked projections: one (T,U)x(U,H*D) MXU matmul each (all heads at once).
    # 1/temper is already folded into wq_ref, so no score scaling is needed.
    Qa = jnp.dot(q, wq_ref[...], preferred_element_type=jnp.float32)   # (Tq, H*D)
    Ka = jnp.dot(x, wk_ref[...], preferred_element_type=jnp.float32)   # (Tk, H*D)
    Va = jnp.dot(x, wv_ref[...], preferred_element_type=jnp.float32)   # (Tk, H*D)

    # Per-head scaled dot-product attention (unrolled; scores are inherently
    # per-head).  Everything stays in VMEM / registers.
    ctx_heads = []
    for h in range(H):
        lo, hi = h * D, (h + 1) * D
        Qh = Qa[:, lo:hi]              # (Tq, D)
        Kh = Ka[:, lo:hi]              # (Tk, D)
        Vh = Va[:, lo:hi]              # (Tk, D)

        # s = Qh @ Kh^T  (contract on D), already scaled by 1/sqrt(U) via Wq.
        s = jax.lax.dot_general(Qh, Kh, (((1,), (1,)), ((), ())),
                                preferred_element_type=jnp.float32)    # (Tq, Tk)
        # numerically-stable softmax over last dim (matches nn.Softmax(dim=-1))
        s = s - jnp.max(s, axis=-1, keepdims=True)
        p = jnp.exp(s)
        p = p * pl.reciprocal(jnp.sum(p, axis=-1, keepdims=True), approx=False)

        ctx_heads.append(jnp.dot(p, Vh, preferred_element_type=jnp.float32))
        attn_ref[h, 0] = p.astype(attn_ref.dtype)

    # Head concat: matches torch.cat(torch.split(out, B, dim=0), dim=-1).
    ctx_cat = jnp.concatenate(ctx_heads, axis=-1)                      # (Tq, U)

    # Output projection + bias + residual (dropout = identity in eval mode).
    y = jnp.dot(ctx_cat, wp_ref[...], preferred_element_type=jnp.float32)
    y = y + bp_ref[...] + q

    # LayerNorm over the feature dim.
    mean = jnp.mean(y, axis=-1, keepdims=True)
    var = jnp.mean((y - mean) ** 2, axis=-1, keepdims=True)
    out = (y - mean) * jax.lax.rsqrt(var + eps) * g_ref[...] + b_ref[...]
    out_ref[0] = out.astype(out_ref.dtype)


# ----------------------------------------------------------------------------
# Wrapper
# ----------------------------------------------------------------------------
def simple_multi_head_attention(query, values, params, *, num_heads):
    """query: (B, Tq, U), values: (B, Tk, U).
    Returns (out (B,Tq,U), attns (H*B,Tq,Tk)) with attn row index = h*B + b."""
    B, Tq, U = query.shape
    _, Tk, _ = values.shape
    H = num_heads

    out, attn = pl.pallas_call(
        functools.partial(_fused_mha_kernel, num_heads=H, eps=1e-6),
        out_shape=(
            jax.ShapeDtypeStruct((B, Tq, U), jnp.float32),
            jax.ShapeDtypeStruct((H, B, Tq, Tk), jnp.float32),
        ),
        grid=(B,),
        in_specs=[
            pl.BlockSpec((1, Tq, U), lambda b: (b, 0, 0)),   # query
            pl.BlockSpec((1, Tk, U), lambda b: (b, 0, 0)),   # values
            pl.BlockSpec((U, U), lambda b: (0, 0)),          # Wq stacked (pre-scaled)
            pl.BlockSpec((U, U), lambda b: (0, 0)),          # Wk stacked
            pl.BlockSpec((U, U), lambda b: (0, 0)),          # Wv stacked
            pl.BlockSpec((U, U), lambda b: (0, 0)),          # Wp^T
            pl.BlockSpec((1, U), lambda b: (0, 0)),          # bp
            pl.BlockSpec((1, U), lambda b: (0, 0)),          # gamma
            pl.BlockSpec((1, U), lambda b: (0, 0)),          # beta
        ],
        out_specs=(
            pl.BlockSpec((1, Tq, U), lambda b: (b, 0, 0)),
            pl.BlockSpec((H, 1, Tq, Tk), lambda b: (0, b, 0, 0)),
        ),
        compiler_params=pltpu.CompilerParams(dimension_semantics=("parallel",)),
    )(query, values,
      params["wq_s"], params["wk_s"], params["wv_s"],
      params["wp_t"], params["bp"], params["gamma"], params["beta"])

    attns = attn.reshape(H * B, Tq, Tk)   # contiguous view; row = h*B + b
    return out, attns


def init_params(key, num_heads, num_units):
    """Deterministic parameter init mirroring the module's shapes."""
    H, U = num_heads, num_units
    D = U // H
    k = jax.random.split(key, 5)
    xavier_std = (2.0 / (U + D)) ** 0.5          # init.xavier_normal on (H, U, D)
    wq = xavier_std * jax.random.normal(k[0], (H, U, D), jnp.float32)
    wk = xavier_std * jax.random.normal(k[1], (H, U, D), jnp.float32)
    wv = xavier_std * jax.random.normal(k[2], (H, U, D), jnp.float32)
    bound = 1.0 / (U ** 0.5)                     # nn.Linear(H*D, U) default init
    wp = jax.random.uniform(k[3], (U, H * D), jnp.float32, -bound, bound)
    bp = jax.random.uniform(k[4], (1, U), jnp.float32, -bound, bound)

    temper = float(U) ** 0.5                     # ScaledDotProductAttention(dim=U)
    stack = lambda w: jnp.transpose(w, (1, 0, 2)).reshape(U, H * D)

    return dict(
        # per-head form (used by the pure-JAX reference)
        wq=wq, wk=wk, wv=wv,
        # stacked forms consumed by the fused kernel; 1/temper folded into Wq
        wq_s=stack(wq) / temper,
        wk_s=stack(wk),
        wv_s=stack(wv),
        wp_t=wp.T,                               # y = ctx @ wp_t
        bp=bp,
        gamma=jnp.ones((1, U), jnp.float32),
        beta=jnp.zeros((1, U), jnp.float32),
    )


def _reference(query, values, params, num_heads):
    """Pure-JAX reference of the PyTorch forward (eval mode)."""
    B, Tq, U = query.shape
    H = num_heads
    D = U // H
    Q = jnp.einsum("btu,hud->hbtd", query, params["wq"])
    K = jnp.einsum("bsu,hud->hbsd", values, params["wk"])
    V = jnp.einsum("bsu,hud->hbsd", values, params["wv"])
    s = jnp.einsum("hbtd,hbsd->hbts", Q, K) / jnp.sqrt(jnp.float32(U))
    p = jax.nn.softmax(s, axis=-1)
    ctx = jnp.einsum("hbts,hbsd->hbtd", p, V)
    ctx_cat = jnp.transpose(ctx, (1, 2, 0, 3)).reshape(B, Tq, U)
    y = ctx_cat @ params["wp_t"] + params["bp"] + query
    mean = jnp.mean(y, axis=-1, keepdims=True)
    var = jnp.mean((y - mean) ** 2, axis=-1, keepdims=True)
    out = (y - mean) * jax.lax.rsqrt(var + 1e-6) * params["gamma"] + params["beta"]
    return out, p.reshape(H * B, Tq, -1)


if __name__ == "__main__":
    num_heads, num_units = 4, 32
    B, Tq, Tk = 2, 8, 8

    key = jax.random.PRNGKey(0)
    kq, kv, kp = jax.random.split(key, 3)
    query = jax.random.normal(kq, (B, Tq, num_units), jnp.float32)
    values = jax.random.normal(kv, (B, Tk, num_units), jnp.float32)
    params = init_params(kp, num_heads, num_units)

    out, attns = simple_multi_head_attention(query, values, params, num_heads=num_heads)
    jax.block_until_ready((out, attns))

    ref_out, ref_attn = _reference(query, values, params, num_heads)
    assert jnp.allclose(out, ref_out, atol=1e-4, rtol=1e-4)
    assert jnp.allclose(attns, ref_attn, atol=1e-5, rtol=1e-4)

    print("KERNEL_OK")
</pallas_src>

<mosaic_0001>
module attributes {stable_mosaic.version = 11 : i64} {
  func.func @_fused_mha_kernel(%arg0: i32, %arg1: memref<1x8x32xf32, #tpu.memory_space<vmem>>, %arg2: memref<1x8x32xf32, #tpu.memory_space<vmem>>, %arg3: memref<32x32xf32, #tpu.memory_space<vmem>>, %arg4: memref<32x32xf32, #tpu.memory_space<vmem>>, %arg5: memref<32x32xf32, #tpu.memory_space<vmem>>, %arg6: memref<32x32xf32, #tpu.memory_space<vmem>>, %arg7: memref<1x32xf32, #tpu.memory_space<vmem>>, %arg8: memref<1x32xf32, #tpu.memory_space<vmem>>, %arg9: memref<1x32xf32, #tpu.memory_space<vmem>>, %arg10: memref<1x8x32xf32, #tpu.memory_space<vmem>>, %arg11: memref<4x1x8x8xf32, #tpu.memory_space<vmem>>) attributes {dimension_semantics = [#tpu.dimension_semantics<parallel>], iteration_bounds = array<i64: 2>, scalar_prefetch = 0 : i64, scratch_operands = 0 : i64, tpu.core_type = #tpu.core_type<tc>, window_params = [{transform_indices = @transform_0, window_bounds = array<i64: 1, 8, 32>}, {transform_indices = @transform_1, window_bounds = array<i64: 1, 8, 32>}, {pipeline_mode = #tpu.pipeline_mode<synchronous>, transform_indices = @transform_2, window_bounds = array<i64: 32, 32>}, {pipeline_mode = #tpu.pipeline_mode<synchronous>, transform_indices = @transform_3, window_bounds = array<i64: 32, 32>}, {pipeline_mode = #tpu.pipeline_mode<synchronous>, transform_indices = @transform_4, window_bounds = array<i64: 32, 32>}, {pipeline_mode = #tpu.pipeline_mode<synchronous>, transform_indices = @transform_5, window_bounds = array<i64: 32, 32>}, {pipeline_mode = #tpu.pipeline_mode<synchronous>, transform_indices = @transform_6, window_bounds = array<i64: 1, 32>}, {pipeline_mode = #tpu.pipeline_mode<synchronous>, transform_indices = @transform_7, window_bounds = array<i64: 1, 32>}, {pipeline_mode = #tpu.pipeline_mode<synchronous>, transform_indices = @transform_8, window_bounds = array<i64: 1, 32>}, {transform_indices = @transform_9, window_bounds = array<i64: 1, 8, 32>}, {transform_indices = @transform_10, window_bounds = array<i64: 4, 1, 8, 8>}]} {
    %c0 = arith.constant 0 : index
    %c0_0 = arith.constant 0 : index
    %c0_1 = arith.constant 0 : index
    %0 = vector.load %arg1[%c0, %c0_0, %c0_1] : memref<1x8x32xf32, #tpu.memory_space<vmem>>, vector<1x8x32xf32>
    %1 = vector.shape_cast %0 : vector<1x8x32xf32> to vector<8x32xf32>
    %c0_2 = arith.constant 0 : index
    %c0_3 = arith.constant 0 : index
    %c0_4 = arith.constant 0 : index
    %2 = vector.load %arg2[%c0_2, %c0_3, %c0_4] : memref<1x8x32xf32, #tpu.memory_space<vmem>>, vector<1x8x32xf32>
    %3 = vector.shape_cast %2 : vector<1x8x32xf32> to vector<8x32xf32>
    %c0_5 = arith.constant 0 : index
    %c0_6 = arith.constant 0 : index
    %4 = vector.load %arg3[%c0_5, %c0_6] : memref<32x32xf32, #tpu.memory_space<vmem>>, vector<32x32xf32>
    %cst = arith.constant dense<0.000000e+00> : vector<8x32xf32>
    %5 = tpu.matmul %1, %4, %cst {dimension_numbers = #tpu.dot_dimension_numbers<[1], [0], [0], [1], [0, 0, 1, 1], [], []>} : vector<8x32xf32>, vector<32x32xf32>, vector<8x32xf32> -> vector<8x32xf32>
    %c0_7 = arith.constant 0 : index
    %c0_8 = arith.constant 0 : index
    %6 = vector.load %arg4[%c0_7, %c0_8] : memref<32x32xf32, #tpu.memory_space<vmem>>, vector<32x32xf32>
    %cst_9 = arith.constant dense<0.000000e+00> : vector<8x32xf32>
    %7 = tpu.matmul %3, %6, %cst_9 {dimension_numbers = #tpu.dot_dimension_numbers<[1], [0], [0], [1], [0, 0, 1, 1], [], []>} : vector<8x32xf32>, vector<32x32xf32>, vector<8x32xf32> -> vector<8x32xf32>
    %c0_10 = arith.constant 0 : index
    %c0_11 = arith.constant 0 : index
    %8 = vector.load %arg5[%c0_10, %c0_11] : memref<32x32xf32, #tpu.memory_space<vmem>>, vector<32x32xf32>
    %cst_12 = arith.constant dense<0.000000e+00> : vector<8x32xf32>
    %9 = tpu.matmul %3, %8, %cst_12 {dimension_numbers = #tpu.dot_dimension_numbers<[1], [0], [0], [1], [0, 0, 1, 1], [], []>} : vector<8x32xf32>, vector<32x32xf32>, vector<8x32xf32> -> vector<8x32xf32>
    %10 = vector.extract_strided_slice %5 {offsets = [0, 0], sizes = [8, 8], strides = [1, 1]} : vector<8x32xf32> to vector<8x8xf32>
    %11 = vector.extract_strided_slice %7 {offsets = [0, 0], sizes = [8, 8], strides = [1, 1]} : vector<8x32xf32> to vector<8x8xf32>
    %12 = vector.extract_strided_slice %9 {offsets = [0, 0], sizes = [8, 8], strides = [1, 1]} : vector<8x32xf32> to vector<8x8xf32>
    %cst_13 = arith.constant dense<0.000000e+00> : vector<8x8xf32>
    %13 = tpu.matmul %10, %11, %cst_13 {dimension_numbers = #tpu.dot_dimension_numbers<[1], [1], [0], [0], [0, 0, 1, 0], [], []>} : vector<8x8xf32>, vector<8x8xf32>, vector<8x8xf32> -> vector<8x8xf32>
    %cst_14 = arith.constant dense<0xFF800000> : vector<8xf32>
    %14 = vector.multi_reduction <maximumf>, %13, %cst_14 [1] : vector<8x8xf32> to vector<8xf32>
    %15 = vector.shape_cast %14 : vector<8xf32> to vector<8x1xf32>
    %16 = vector.broadcast %15 : vector<8x1xf32> to vector<8x8xf32>
    %17 = arith.subf %13, %16 : vector<8x8xf32>
    %18 = math.exp %17 : vector<8x8xf32>
    %cst_15 = arith.constant dense<0.000000e+00> : vector<8xf32>
    %19 = vector.multi_reduction <add>, %18, %cst_15 [1] : vector<8x8xf32> to vector<8xf32>
    %20 = vector.shape_cast %19 : vector<8xf32> to vector<8x1xf32>
    %21 = tpu.reciprocal %20 : vector<8x1xf32> -> vector<8x1xf32>
    %22 = vector.broadcast %21 : vector<8x1xf32> to vector<8x8xf32>
    %23 = arith.mulf %18, %22 : vector<8x8xf32>
    %cst_16 = arith.constant dense<0.000000e+00> : vector<8x8xf32>
    %24 = tpu.matmul %23, %12, %cst_16 {dimension_numbers = #tpu.dot_dimension_numbers<[1], [0], [0], [1], [0, 0, 1, 1], [], []>} : vector<8x8xf32>, vector<8x8xf32>, vector<8x8xf32> -> vector<8x8xf32>
    %c0_17 = arith.constant 0 : index
    %c0_18 = arith.constant 0 : index
    %c0_19 = arith.constant 0 : index
    %c0_20 = arith.constant 0 : index
    %25 = vector.load %arg11[%c0_17, %c0_18, %c0_19, %c0_20] : memref<4x1x8x8xf32, #tpu.memory_space<vmem>>, vector<1x1x8x8xf32>
    %26 = vector.shape_cast %25 : vector<1x1x8x8xf32> to vector<8x8xf32>
    %27 = vector.shape_cast %23 : vector<8x8xf32> to vector<1x1x8x8xf32>
    tpu.vector_store %arg11[%c0_17, %c0_18, %c0_19, %c0_20], %27 {strides = array<i32>} : memref<4x1x8x8xf32, #tpu.memory_space<vmem>>, vector<1x1x8x8xf32>,
    %28 = vector.extract_strided_slice %5 {offsets = [0, 8], sizes = [8, 8], strides = [1, 1]} : vector<8x32xf32> to vector<8x8xf32>
    %29 = vector.extract_strided_slice %7 {offsets = [0, 8], sizes = [8, 8], strides = [1, 1]} : vector<8x32xf32> to vector<8x8xf32>
    %30 = vector.extract_strided_slice %9 {offsets = [0, 8], sizes = [8, 8], strides = [1, 1]} : vector<8x32xf32> to vector<8x8xf32>
    %cst_21 = arith.constant dense<0.000000e+00> : vector<8x8xf32>
    %31 = tpu.matmul %28, %29, %cst_21 {dimension_numbers = #tpu.dot_dimension_numbers<[1], [1], [0], [0], [0, 0, 1, 0], [], []>} : vector<8x8xf32>, vector<8x8xf32>, vector<8x8xf32> -> vector<8x8xf32>
    %cst_22 = arith.constant dense<0xFF800000> : vector<8xf32>
    %32 = vector.multi_reduction <maximumf>, %31, %cst_22 [1] : vector<8x8xf32> to vector<8xf32>
    %33 = vector.shape_cast %32 : vector<8xf32> to vector<8x1xf32>
    %34 = vector.broadcast %33 : vector<8x1xf32> to vector<8x8xf32>
    %35 = arith.subf %31, %34 : vector<8x8xf32>
    %36 = math.exp %35 : vector<8x8xf32>
    %cst_23 = arith.constant dense<0.000000e+00> : vector<8xf32>
    %37 = vector.multi_reduction <add>, %36, %cst_23 [1] : vector<8x8xf32> to vector<8xf32>
    %38 = vector.shape_cast %37 : vector<8xf32> to vector<8x1xf32>
    %39 = tpu.reciprocal %38 : vector<8x1xf32> -> vector<8x1xf32>
    %40 = vector.broadcast %39 : vector<8x1xf32> to vector<8x8xf32>
    %41 = arith.mulf %36, %40 : vector<8x8xf32>
    %cst_24 = arith.constant dense<0.000000e+00> : vector<8x8xf32>
    %42 = tpu.matmul %41, %30, %cst_24 {dimension_numbers = #tpu.dot_dimension_numbers<[1], [0], [0], [1], [0, 0, 1, 1], [], []>} : vector<8x8xf32>, vector<8x8xf32>, vector<8x8xf32> -> vector<8x8xf32>
    %c1 = arith.constant 1 : index
    %c0_25 = arith.constant 0 : index
    %c0_26 = arith.constant 0 : index
    %c0_27 = arith.constant 0 : index
    %43 = vector.load %arg11[%c1, %c0_25, %c0_26, %c0_27] : memref<4x1x8x8xf32, #tpu.memory_space<vmem>>, vector<1x1x8x8xf32>
    %44 = vector.shape_cast %43 : vector<1x1x8x8xf32> to vector<8x8xf32>
    %45 = vector.shape_cast %41 : vector<8x8xf32> to vector<1x1x8x8xf32>
    tpu.vector_store %arg11[%c1, %c0_25, %c0_26, %c0_27], %45 {strides = array<i32>} : memref<4x1x8x8xf32, #tpu.memory_space<vmem>>, vector<1x1x8x8xf32>,
    %46 = vector.extract_strided_slice %5 {offsets = [0, 16], sizes = [8, 8], strides = [1, 1]} : vector<8x32xf32> to vector<8x8xf32>
    %47 = vector.extract_strided_slice %7 {offsets = [0, 16], sizes = [8, 8], strides = [1, 1]} : vector<8x32xf32> to vector<8x8xf32>
    %48 = vector.extract_strided_slice %9 {offsets = [0, 16], sizes = [8, 8], strides = [1, 1]} : vector<8x32xf32> to vector<8x8xf32>
    %cst_28 = arith.constant dense<0.000000e+00> : vector<8x8xf32>
    %49 = tpu.matmul %46, %47, %cst_28 {dimension_numbers = #tpu.dot_dimension_numbers<[1], [1], [0], [0], [0, 0, 1, 0], [], []>} : vector<8x8xf32>, vector<8x8xf32>, vector<8x8xf32> -> vector<8x8xf32>
    %cst_29 = arith.constant dense<0xFF800000> : vector<8xf32>
    %50 = vector.multi_reduction <maximumf>, %49, %cst_29 [1] : vector<8x8xf32> to vector<8xf32>
    %51 = vector.shape_cast %50 : vector<8xf32> to vector<8x1xf32>
    %52 = vector.broadcast %51 : vector<8x1xf32> to vector<8x8xf32>
    %53 = arith.subf %49, %52 : vector<8x8xf32>
    %54 = math.exp %53 : vector<8x8xf32>
    %cst_30 = arith.constant dense<0.000000e+00> : vector<8xf32>
    %55 = vector.multi_reduction <add>, %54, %cst_30 [1] : vector<8x8xf32> to vector<8xf32>
    %56 = vector.shape_cast %55 : vector<8xf32> to vector<8x1xf32>
    %57 = tpu.reciprocal %56 : vector<8x1xf32> -> vector<8x1xf32>
    %58 = vector.broadcast %57 : vector<8x1xf32> to vector<8x8xf32>
    %59 = arith.mulf %54, %58 : vector<8x8xf32>
    %cst_31 = arith.constant dense<0.000000e+00> : vector<8x8xf32>
    %60 = tpu.matmul %59, %48, %cst_31 {dimension_numbers = #tpu.dot_dimension_numbers<[1], [0], [0], [1], [0, 0, 1, 1], [], []>} : vector<8x8xf32>, vector<8x8xf32>, vector<8x8xf32> -> vector<8x8xf32>
    %c2 = arith.constant 2 : index
    %c0_32 = arith.constant 0 : index
    %c0_33 = arith.constant 0 : index
    %c0_34 = arith.constant 0 : index
    %61 = vector.load %arg11[%c2, %c0_32, %c0_33, %c0_34] : memref<4x1x8x8xf32, #tpu.memory_space<vmem>>, vector<1x1x8x8xf32>
    %62 = vector.shape_cast %61 : vector<1x1x8x8xf32> to vector<8x8xf32>
    %63 = vector.shape_cast %59 : vector<8x8xf32> to vector<1x1x8x8xf32>
    tpu.vector_store %arg11[%c2, %c0_32, %c0_33, %c0_34], %63 {strides = array<i32>} : memref<4x1x8x8xf32, #tpu.memory_space<vmem>>, vector<1x1x8x8xf32>,
    %64 = vector.extract_strided_slice %5 {offsets = [0, 24], sizes = [8, 8], strides = [1, 1]} : vector<8x32xf32> to vector<8x8xf32>
    %65 = vector.extract_strided_slice %7 {offsets = [0, 24], sizes = [8, 8], strides = [1, 1]} : vector<8x32xf32> to vector<8x8xf32>
    %66 = vector.extract_strided_slice %9 {offsets = [0, 24], sizes = [8, 8], strides = [1, 1]} : vector<8x32xf32> to vector<8x8xf32>
    %cst_35 = arith.constant dense<0.000000e+00> : vector<8x8xf32>
    %67 = tpu.matmul %64, %65, %cst_35 {dimension_numbers = #tpu.dot_dimension_numbers<[1], [1], [0], [0], [0, 0, 1, 0], [], []>} : vector<8x8xf32>, vector<8x8xf32>, vector<8x8xf32> -> vector<8x8xf32>
    %cst_36 = arith.constant dense<0xFF800000> : vector<8xf32>
    %68 = vector.multi_reduction <maximumf>, %67, %cst_36 [1] : vector<8x8xf32> to vector<8xf32>
    %69 = vector.shape_cast %68 : vector<8xf32> to vector<8x1xf32>
    %70 = vector.broadcast %69 : vector<8x1xf32> to vector<8x8xf32>
    %71 = arith.subf %67, %70 : vector<8x8xf32>
    %72 = math.exp %71 : vector<8x8xf32>
    %cst_37 = arith.constant dense<0.000000e+00> : vector<8xf32>
    %73 = vector.multi_reduction <add>, %72, %cst_37 [1] : vector<8x8xf32> to vector<8xf32>
    %74 = vector.shape_cast %73 : vector<8xf32> to vector<8x1xf32>
    %75 = tpu.reciprocal %74 : vector<8x1xf32> -> vector<8x1xf32>
    %76 = vector.broadcast %75 : vector<8x1xf32> to vector<8x8xf32>
    %77 = arith.mulf %72, %76 : vector<8x8xf32>
    %cst_38 = arith.constant dense<0.000000e+00> : vector<8x8xf32>
    %78 = tpu.matmul %77, %66, %cst_38 {dimension_numbers = #tpu.dot_dimension_numbers<[1], [0], [0], [1], [0, 0, 1, 1], [], []>} : vector<8x8xf32>, vector<8x8xf32>, vector<8x8xf32> -> vector<8x8xf32>
    %c3 = arith.constant 3 : index
    %c0_39 = arith.constant 0 : index
    %c0_40 = arith.constant 0 : index
    %c0_41 = arith.constant 0 : index
    %79 = vector.load %arg11[%c3, %c0_39, %c0_40, %c0_41] : memref<4x1x8x8xf32, #tpu.memory_space<vmem>>, vector<1x1x8x8xf32>
    %80 = vector.shape_cast %79 : vector<1x1x8x8xf32> to vector<8x8xf32>
    %81 = vector.shape_cast %77 : vector<8x8xf32> to vector<1x1x8x8xf32>
    tpu.vector_store %arg11[%c3, %c0_39, %c0_40, %c0_41], %81 {strides = array<i32>} : memref<4x1x8x8xf32, #tpu.memory_space<vmem>>, vector<1x1x8x8xf32>,
    %82 = tpu.concatenate %24, %42, %60, %78 in 1 : vector<8x8xf32>, vector<8x8xf32>, vector<8x8xf32>, vector<8x8xf32> -> vector<8x32xf32>
    %c0_42 = arith.constant 0 : index
    %c0_43 = arith.constant 0 : index
    %83 = vector.load %arg6[%c0_42, %c0_43] : memref<32x32xf32, #tpu.memory_space<vmem>>, vector<32x32xf32>
    %cst_44 = arith.constant dense<0.000000e+00> : vector<8x32xf32>
    %84 = tpu.matmul %82, %83, %cst_44 {dimension_numbers = #tpu.dot_dimension_numbers<[1], [0], [0], [1], [0, 0, 1, 1], [], []>} : vector<8x32xf32>, vector<32x32xf32>, vector<8x32xf32> -> vector<8x32xf32>
    %c0_45 = arith.constant 0 : index
    %c0_46 = arith.constant 0 : index
    %85 = vector.load %arg7[%c0_45, %c0_46] : memref<1x32xf32, #tpu.memory_space<vmem>>, vector<1x32xf32>
    %86 = vector.broadcast %85 : vector<1x32xf32> to vector<8x32xf32>
    %87 = arith.addf %84, %86 : vector<8x32xf32>
    %88 = arith.addf %87, %1 : vector<8x32xf32>
    %cst_47 = arith.constant dense<0.000000e+00> : vector<8xf32>
    %89 = vector.multi_reduction <add>, %88, %cst_47 [1] : vector<8x32xf32> to vector<8xf32>
    %90 = vector.shape_cast %89 : vector<8xf32> to vector<8x1xf32>
    %cst_48 = arith.constant 3.200000e+01 : f32
    %91 = vector.broadcast %cst_48 : f32 to vector<8x1xf32>
    %92 = arith.divf %90, %91 : vector<8x1xf32>
    %93 = vector.broadcast %92 : vector<8x1xf32> to vector<8x32xf32>
    %94 = arith.subf %88, %93 : vector<8x32xf32>
    %95 = arith.mulf %94, %94 : vector<8x32xf32>
    %cst_49 = arith.constant dense<0.000000e+00> : vector<8xf32>
    %96 = vector.multi_reduction <add>, %95, %cst_49 [1] : vector<8x32xf32> to vector<8xf32>
    %97 = vector.shape_cast %96 : vector<8xf32> to vector<8x1xf32>
    %cst_50 = arith.constant 3.200000e+01 : f32
    %98 = vector.broadcast %cst_50 : f32 to vector<8x1xf32>
    %99 = arith.divf %97, %98 : vector<8x1xf32>
    %100 = vector.broadcast %92 : vector<8x1xf32> to vector<8x32xf32>
    %101 = arith.subf %88, %100 : vector<8x32xf32>
    %cst_51 = arith.constant 9.99999997E-7 : f32
    %102 = vector.broadcast %cst_51 : f32 to vector<8x1xf32>
    %103 = arith.addf %99, %102 : vector<8x1xf32>
    %104 = math.rsqrt %103 : vector<8x1xf32>
    %105 = vector.broadcast %104 : vector<8x1xf32> to vector<8x32xf32>
    %106 = arith.mulf %101, %105 : vector<8x32xf32>
    %c0_52 = arith.constant 0 : index
    %c0_53 = arith.constant 0 : index
    %107 = vector.load %arg8[%c0_52, %c0_53] : memref<1x32xf32, #tpu.memory_space<vmem>>, vector<1x32xf32>
    %108 = vector.broadcast %107 : vector<1x32xf32> to vector<8x32xf32>
    %109 = arith.mulf %106, %108 : vector<8x32xf32>
    %c0_54 = arith.constant 0 : index
    %c0_55 = arith.constant 0 : index
    %110 = vector.load %arg9[%c0_54, %c0_55] : memref<1x32xf32, #tpu.memory_space<vmem>>, vector<1x32xf32>
    %111 = vector.broadcast %110 : vector<1x32xf32> to vector<8x32xf32>
    %112 = arith.addf %109, %111 : vector<8x32xf32>
    %c0_56 = arith.constant 0 : index
    %c0_57 = arith.constant 0 : index
    %c0_58 = arith.constant 0 : index
    %113 = vector.load %arg10[%c0_56, %c0_57, %c0_58] : memref<1x8x32xf32, #tpu.memory_space<vmem>>, vector<1x8x32xf32>
    %114 = vector.shape_cast %113 : vector<1x8x32xf32> to vector<8x32xf32>
    %115 = vector.shape_cast %112 : vector<8x32xf32> to vector<1x8x32xf32>
    tpu.vector_store %arg10[%c0_56, %c0_57, %c0_58], %115 {strides = array<i32>} : memref<1x8x32xf32, #tpu.memory_space<vmem>>, vector<1x8x32xf32>,
    return
  }
  func.func @transform_0(%arg0: i32) -> (i32, i32, i32) {
    %c0_i32 = arith.constant 0 : i32
    %c0_i32_0 = arith.constant 0 : i32
    %c0_i32_1 = arith.constant 0 : i32
    return %arg0, %c0_i32, %c0_i32_0 : i32, i32, i32
  }
  func.func @transform_1(%arg0: i32) -> (i32, i32, i32) {
    %c0_i32 = arith.constant 0 : i32
    %c0_i32_0 = arith.constant 0 : i32
    %c0_i32_1 = arith.constant 0 : i32
    return %arg0, %c0_i32, %c0_i32_0 : i32, i32, i32
  }
  func.func @transform_2(%arg0: i32) -> (i32, i32) {
    %c0_i32 = arith.constant 0 : i32
    %c0_i32_0 = arith.constant 0 : i32
    %c0_i32_1 = arith.constant 0 : i32
    return %c0_i32, %c0_i32_0 : i32, i32
  }
  func.func @transform_3(%arg0: i32) -> (i32, i32) {
    %c0_i32 = arith.constant 0 : i32
    %c0_i32_0 = arith.constant 0 : i32
    %c0_i32_1 = arith.constant 0 : i32
    return %c0_i32, %c0_i32_0 : i32, i32
  }
  func.func @transform_4(%arg0: i32) -> (i32, i32) {
    %c0_i32 = arith.constant 0 : i32
    %c0_i32_0 = arith.constant 0 : i32
    %c0_i32_1 = arith.constant 0 : i32
    return %c0_i32, %c0_i32_0 : i32, i32
  }
  func.func @transform_5(%arg0: i32) -> (i32, i32) {
    %c0_i32 = arith.constant 0 : i32
    %c0_i32_0 = arith.constant 0 : i32
    %c0_i32_1 = arith.constant 0 : i32
    return %c0_i32, %c0_i32_0 : i32, i32
  }
  func.func @transform_6(%arg0: i32) -> (i32, i32) {
    %c0_i32 = arith.constant 0 : i32
    %c0_i32_0 = arith.constant 0 : i32
    %c0_i32_1 = arith.constant 0 : i32
    return %c0_i32, %c0_i32_0 : i32, i32
  }
  func.func @transform_7(%arg0: i32) -> (i32, i32) {
    %c0_i32 = arith.constant 0 : i32
    %c0_i32_0 = arith.constant 0 : i32
    %c0_i32_1 = arith.constant 0 : i32
    return %c0_i32, %c0_i32_0 : i32, i32
  }
  func.func @transform_8(%arg0: i32) -> (i32, i32) {
    %c0_i32 = arith.constant 0 : i32
    %c0_i32_0 = arith.constant 0 : i32
    %c0_i32_1 = arith.constant 0 : i32
    return %c0_i32, %c0_i32_0 : i32, i32
  }
  func.func @transform_9(%arg0: i32) -> (i32, i32, i32) {
    %c0_i32 = arith.constant 0 : i32
    %c0_i32_0 = arith.constant 0 : i32
    %c0_i32_1 = arith.constant 0 : i32
    return %arg0, %c0_i32, %c0_i32_0 : i32, i32, i32
  }
  func.func @transform_10(%arg0: i32) -> (i32, i32, i32, i32) {
    %c0_i32 = arith.constant 0 : i32
    %c0_i32_0 = arith.constant 0 : i32
    %c0_i32_1 = arith.constant 0 : i32
    %c0_i32_2 = arith.constant 0 : i32
    return %c0_i32, %arg0, %c0_i32_0, %c0_i32_1 : i32, i32, i32, i32
  }
}

</mosaic_0001>

<llo_original>
// kernel: tpu_custom_call.1
$region0: #{tpu_custom_call.1}
  #allocation0 [shape = 'u32[]', space=smem, size = 0x4, offset = 0x4, fixed_abs, tag = 'smem constant byte address 0x4 - core index']
  #allocation1 [shape = 'u32[72,128]{1,0:T(1,128)}', space=vmem, size = 0x9000, scoped, tag = 'internal scratch']
  %s0 = inlined_call_operand.hbm [shape: f32[2,8,32], index: 0, kind: input, shape index: {}]
  %s1 = inlined_call_operand.hbm [shape: f32[2,8,32], index: 1, kind: input, shape index: {}]
  %s2 = inlined_call_operand.hbm [shape: f32[32,32], index: 2, kind: input, shape index: {}]
  %s3 = inlined_call_operand.hbm [shape: f32[32,32], index: 3, kind: input, shape index: {}]
  %s4 = inlined_call_operand.hbm [shape: f32[32,32], index: 4, kind: input, shape index: {}]
  %s5 = inlined_call_operand.hbm [shape: f32[32,32], index: 5, kind: input, shape index: {}]
  %s6 = inlined_call_operand.vmem [shape: f32[1,32], index: 6, kind: input, shape index: {}]
  %s7 = inlined_call_operand.vmem [shape: f32[1,32], index: 7, kind: input, shape index: {}]
  %s8 = inlined_call_operand.vmem [shape: f32[1,32], index: 8, kind: input, shape index: {}]
  %s9 = inlined_call_operand.hbm [shape: f32[2,8,32], index: 9, kind: output, shape index: {0}]
  %s10 = inlined_call_operand.hbm [shape: f32[4,2,8,8], index: 10, kind: output, shape index: {1}]
  %11 = xla_tuple %s9, %s10
  %s12 = sld [smem:[#allocation0]]
  $region101: #{tpu_custom_call.1} parent=0
    _
  %s14 = ssub.s32 1, %s12
  %s15 = scalar_select 0, %s14, %s12
  $region1: #{tpu_custom_call.1} parent=0
    #allocation2 [shape = 'u8[8192]{0}', space=vmem, size = 0x2000, scoped, tag = 'input window, operand 0']
    #allocation3 [shape = 's32[2]{0}', space=sflag, size = 0x8, scoped, tag = 'scoped memory for tpu_custom_call.1']
    #allocation4 [shape = 's32[2]{0}', space=sflag, size = 0x8, scoped, tag = 'scoped memory for tpu_custom_call.1']
    #allocation5 [shape = 'u8[8192]{0}', space=vmem, size = 0x2000, scoped, tag = 'input window, operand 1']
    #allocation6 [shape = 's32[2]{0}', space=sflag, size = 0x8, scoped, tag = 'scoped memory for tpu_custom_call.1']
    #allocation7 [shape = 'u8[16384]{0}', space=vmem, size = 0x4000, scoped, tag = 'input window, operand 2, single buffered']
    #allocation8 [shape = 'u8[16384]{0}', space=vmem, size = 0x4000, scoped, tag = 'input window, operand 3, single buffered']
    #allocation9 [shape = 's32[1]{0}', space=sflag, size = 0x4, scoped, tag = 'scoped memory for tpu_custom_call.1']
    #allocation10 [shape = 'u8[16384]{0}', space=vmem, size = 0x4000, scoped, tag = 'input window, operand 4, single buffered']
    #allocation11 [shape = 'u8[16384]{0}', space=vmem, size = 0x4000, scoped, tag = 'input window, operand 5, single buffered']
    #allocation12 [shape = 's32[1]{0}', space=sflag, size = 0x4, scoped, tag = 'scoped memory for tpu_custom_call.1']
    #allocation13 [shape = 'u8[8192]{0}', space=vmem, size = 0x2000, scoped, tag = 'output window, operand 0']
    #allocation14 [shape = 'u8[32768]{0}', space=vmem, size = 0x8000, scoped, tag = 'output window, operand 1']
    #allocation15 [shape = 's32[2]{0}', space=sflag, size = 0x8, scoped, tag = 'scoped memory for tpu_custom_call.1']
    %16 = vsyncpa [#allocation3], 0
    %s17 = scalar_lea.sflag [#allocation3], 1
    %18 = vsyncpa %s17, 0
    %19 = vsyncpa [#allocation6], 0
    %s20 = scalar_lea.sflag [#allocation6], 1
    %21 = vsyncpa %s20, 0
    %22 = vsyncpa [#allocation9], 0
    %23 = vsyncpa [#allocation12], 0
    %24 = vsyncpa [#allocation4], 0
    %s25 = scalar_lea.sflag [#allocation4], 1
    %26 = vsyncpa %s25, 0
    %27 = vsyncpa [#allocation15], 0
    %s28 = scalar_lea.sflag [#allocation15], 1
    %29 = vsyncpa %s28, 0
    loop: start=0, step=1, limit=4
    $region2: #{tpu_custom_call.1} parent=1 // loop_pre_header
      _
    $region3: #{tpu_custom_call.1} parent=1 // loop_header
      %s31 = sphi 0, %s35
      %p32 = scmp.ge.s32.totalorder %s31, 4
      %s41 = sphi 0, %s43
      %s44 = sphi 0, %s41
      %s45 = sphi 0, %s44
      %s61 = sphi 0, %s45
      %s67 = sphi 0, %s69
      %s70 = sphi 0, %s67
      %s71 = sphi 0, %s70
      %s87 = sphi 0, %s71
      %s91 = sphi 0, %s91
      %s93 = sphi 0, %s91
      %s94 = sphi 0, %s93
      %s108 = sphi 0, %s94
      %s112 = sphi 0, %s112
      %s114 = sphi 0, %s112
      %s115 = sphi 0, %s114
      %s129 = sphi 0, %s115
      %s133 = sphi 0, %s133
      %s135 = sphi 0, %s133
      %s136 = sphi 0, %s135
      %s150 = sphi 0, %s136
      %s154 = sphi 0, %s154
      %s156 = sphi 0, %s154
      %s157 = sphi 0, %s156
      %s171 = sphi 0, %s157
      %s175 = sphi 0, %s175
      %s177 = sphi 0, %s175
      %s178 = sphi 0, %s177
      %s192 = sphi 0, %s178
      %s196 = sphi 0, %s196
      %s198 = sphi 0, %s196
      %s199 = sphi 0, %s198
      %s213 = sphi 0, %s199
      %s217 = sphi 0, %s217
      %s219 = sphi 0, %s217
      %s220 = sphi 0, %s219
      %s234 = sphi 0, %s220
      %s240 = sphi 0, %s242
      %s243 = sphi 0, %s240
      %s244 = sphi 0, %s243
      %s260 = sphi 0, %s244
      %s266 = sphi 0, %s268
      %s269 = sphi 0, %s266
      %s270 = sphi 0, %s269
      %s286 = sphi 0, %s270
    $region4: #{tpu_custom_call.1} parent=1 // loop_header_branch
      %34 = sbr.rel (%p32) target = $region8
    $region5: #{tpu_custom_call.1} parent=1 // loop_body
      %s36 = ssub.s32 %s31, 1
      %s37 = ssub.s32 %s31, 2
      %s38 = sadd.s32 %s31, 1
      %s39 = ssub.s32 %s31, %s38
      %p40 = scmp.eq.s32.totalorder %s39, 0
      %s42 = sadd.s32 %s41, 1
      %s43 = scalar_select %p40, %s41, %s42
      %p46 = pneg %p40
      %p47 = scmp.eq.s32.totalorder %s31, 1
      %p48 = por %p46, %p47
      %p49 = scmp.ne.s32.totalorder %s41, %s44
      %p50 = scmp.eq.s32.totalorder %s31, 0
      %p51 = por %p49, %p50
      %p52 = scmp.ne.s32.totalorder %s41, %s44
      %p53 = scmp.eq.s32.totalorder %s36, 1
      %p54 = por %p52, %p53
      %p55 = scmp.ne.s32.totalorder %s44, %s45
      %p56 = scmp.eq.s32.totalorder %s36, 0
      %p57 = por %p55, %p56
      %p58 = scmp.ne.s32.totalorder %s44, %s45
      %p59 = scmp.eq.s32.totalorder %s37, 1
      %p60 = por %p58, %p59
      %p62 = scmp.ne.s32.totalorder %s45, %s61
      %p63 = scmp.eq.s32.totalorder %s37, 0
      %p64 = por %p62, %p63
      %s65 = ssub.s32 %s31, %s38
      %p66 = scmp.eq.s32.totalorder %s65, 0
      %s68 = sadd.s32 %s67, 1
      %s69 = scalar_select %p66, %s67, %s68
      %p72 = pneg %p66
      %p73 = scmp.eq.s32.totalorder %s31, 1
      %p74 = por %p72, %p73
      %p75 = scmp.ne.s32.totalorder %s67, %s70
      %p76 = scmp.eq.s32.totalorder %s31, 0
      %p77 = por %p75, %p76
      %p78 = scmp.ne.s32.totalorder %s67, %s70
      %p79 = scmp.eq.s32.totalorder %s36, 1
      %p80 = por %p78, %p79
      %p81 = scmp.ne.s32.totalorder %s70, %s71
      %p82 = scmp.eq.s32.totalorder %s36, 0
      %p83 = por %p81, %p82
      %p84 = scmp.ne.s32.totalorder %s70, %s71
      %p85 = scmp.eq.s32.totalorder %s37, 1
      %p86 = por %p84, %p85
      %p88 = scmp.ne.s32.totalorder %s71, %s87
      %p89 = scmp.eq.s32.totalorder %s37, 0
      %p90 = por %p88, %p89
      %s92 = sadd.s32 %s91, 1
      %p95 = scmp.eq.s32.totalorder %s31, 1
      %p96 = scmp.ne.s32.totalorder %s91, %s93
      %p97 = scmp.eq.s32.totalorder %s31, 0
      %p98 = por %p96, %p97
      %p99 = scmp.ne.s32.totalorder %s91, %s93
      %p100 = scmp.eq.s32.totalorder %s36, 1
      %p101 = por %p99, %p100
      %p102 = scmp.ne.s32.totalorder %s93, %s94
      %p103 = scmp.eq.s32.totalorder %s36, 0
      %p104 = por %p102, %p103
      %p105 = scmp.ne.s32.totalorder %s93, %s94
      %p106 = scmp.eq.s32.totalorder %s37, 1
      %p107 = por %p105, %p106
      %p109 = scmp.ne.s32.totalorder %s94, %s108
      %p110 = scmp.eq.s32.totalorder %s37, 0
      %p111 = por %p109, %p110
      %s113 = sadd.s32 %s112, 1
      %p116 = scmp.eq.s32.totalorder %s31, 1
      %p117 = scmp.ne.s32.totalorder %s112, %s114
      %p118 = scmp.eq.s32.totalorder %s31, 0
      %p119 = por %p117, %p118
      %p120 = scmp.ne.s32.totalorder %s112, %s114
      %p121 = scmp.eq.s32.totalorder %s36, 1
      %p122 = por %p120, %p121
      %p123 = scmp.ne.s32.totalorder %s114, %s115
      %p124 = scmp.eq.s32.totalorder %s36, 0
      %p125 = por %p123, %p124
      %p126 = scmp.ne.s32.totalorder %s114, %s115
      %p127 = scmp.eq.s32.totalorder %s37, 1
      %p128 = por %p126, %p127
      %p130 = scmp.ne.s32.totalorder %s115, %s129
      %p131 = scmp.eq.s32.totalorder %s37, 0
      %p132 = por %p130, %p131
      %s134 = sadd.s32 %s133, 1
      %p137 = scmp.eq.s32.totalorder %s31, 1
      %p138 = scmp.ne.s32.totalorder %s133, %s135
      %p139 = scmp.eq.s32.totalorder %s31, 0
      %p140 = por %p138, %p139
      %p141 = scmp.ne.s32.totalorder %s133, %s135
      %p142 = scmp.eq.s32.totalorder %s36, 1
      %p143 = por %p141, %p142
      %p144 = scmp.ne.s32.totalorder %s135, %s136
      %p145 = scmp.eq.s32.totalorder %s36, 0
      %p146 = por %p144, %p145
      %p147 = scmp.ne.s32.totalorder %s135, %s136
      %p148 = scmp.eq.s32.totalorder %s37, 1
      %p149 = por %p147, %p148
      %p151 = scmp.ne.s32.totalorder %s136, %s150
      %p152 = scmp.eq.s32.totalorder %s37, 0
      %p153 = por %p151, %p152
      %s155 = sadd.s32 %s154, 1
      %p158 = scmp.eq.s32.totalorder %s31, 1
      %p159 = scmp.ne.s32.totalorder %s154, %s156
      %p160 = scmp.eq.s32.totalorder %s31, 0
      %p161 = por %p159, %p160
      %p162 = scmp.ne.s32.totalorder %s154, %s156
      %p163 = scmp.eq.s32.totalorder %s36, 1
      %p164 = por %p162, %p163
      %p165 = scmp.ne.s32.totalorder %s156, %s157
      %p166 = scmp.eq.s32.totalorder %s36, 0
      %p167 = por %p165, %p166
      %p168 = scmp.ne.s32.totalorder %s156, %s157
      %p169 = scmp.eq.s32.totalorder %s37, 1
      %p170 = por %p168, %p169
      %p172 = scmp.ne.s32.totalorder %s157, %s171
      %p173 = scmp.eq.s32.totalorder %s37, 0
      %p174 = por %p172, %p173
      %s176 = sadd.s32 %s175, 1
      %p179 = scmp.eq.s32.totalorder %s31, 1
      %p180 = scmp.ne.s32.totalorder %s175, %s177
      %p181 = scmp.eq.s32.totalorder %s31, 0
      %p182 = por %p180, %p181
      %p183 = scmp.ne.s32.totalorder %s175, %s177
      %p184 = scmp.eq.s32.totalorder %s36, 1
      %p185 = por %p183, %p184
      %p186 = scmp.ne.s32.totalorder %s177, %s178
      %p187 = scmp.eq.s32.totalorder %s36, 0
      %p188 = por %p186, %p187
      %p189 = scmp.ne.s32.totalorder %s177, %s178
      %p190 = scmp.eq.s32.totalorder %s37, 1
      %p191 = por %p189, %p190
      %p193 = scmp.ne.s32.totalorder %s178, %s192
      %p194 = scmp.eq.s32.totalorder %s37, 0
      %p195 = por %p193, %p194
      %s197 = sadd.s32 %s196, 1
      %p200 = scmp.eq.s32.totalorder %s31, 1
      %p201 = scmp.ne.s32.totalorder %s196, %s198
      %p202 = scmp.eq.s32.totalorder %s31, 0
      %p203 = por %p201, %p202
      %p204 = scmp.ne.s32.totalorder %s196, %s198
      %p205 = scmp.eq.s32.totalorder %s36, 1
      %p206 = por %p204, %p205
      %p207 = scmp.ne.s32.totalorder %s198, %s199
      %p208 = scmp.eq.s32.totalorder %s36, 0
      %p209 = por %p207, %p208
      %p210 = scmp.ne.s32.totalorder %s198, %s199
      %p211 = scmp.eq.s32.totalorder %s37, 1
      %p212 = por %p210, %p211
      %p214 = scmp.ne.s32.totalorder %s199, %s213
      %p215 = scmp.eq.s32.totalorder %s37, 0
      %p216 = por %p214, %p215
      %s218 = sadd.s32 %s217, 1
      %p221 = scmp.eq.s32.totalorder %s31, 1
      %p222 = scmp.ne.s32.totalorder %s217, %s219
      %p223 = scmp.eq.s32.totalorder %s31, 0
      %p224 = por %p222, %p223
      %p225 = scmp.ne.s32.totalorder %s217, %s219
      %p226 = scmp.eq.s32.totalorder %s36, 1
      %p227 = por %p225, %p226
      %p228 = scmp.ne.s32.totalorder %s219, %s220
      %p229 = scmp.eq.s32.totalorder %s36, 0
      %p230 = por %p228, %p229
      %p231 = scmp.ne.s32.totalorder %s219, %s220
      %p232 = scmp.eq.s32.totalorder %s37, 1
      %p233 = por %p231, %p232
      %p235 = scmp.ne.s32.totalorder %s220, %s234
      %p236 = scmp.eq.s32.totalorder %s37, 0
      %p237 = por %p235, %p236
      %s238 = ssub.s32 %s31, %s38
      %p239 = scmp.eq.s32.totalorder %s238, 0
      %s241 = sadd.s32 %s240, 1
      %s242 = scalar_select %p239, %s240, %s241
      %p245 = pneg %p239
      %p246 = scmp.eq.s32.totalorder %s31, 1
      %p247 = por %p245, %p246
      %p248 = scmp.ne.s32.totalorder %s240, %s243
      %p249 = scmp.eq.s32.totalorder %s31, 0
      %p250 = por %p248, %p249
      %p251 = scmp.ne.s32.totalorder %s240, %s243
      %p252 = scmp.eq.s32.totalorder %s36, 1
      %p253 = por %p251, %p252
      %p254 = scmp.ne.s32.totalorder %s243, %s244
      %p255 = scmp.eq.s32.totalorder %s36, 0
      %p256 = por %p254, %p255
      %p257 = scmp.ne.s32.totalorder %s243, %s244
      %p258 = scmp.eq.s32.totalorder %s37, 1
      %p259 = por %p257, %p258
      %p261 = scmp.ne.s32.totalorder %s244, %s260
      %p262 = scmp.eq.s32.totalorder %s37, 0
      %p263 = por %p261, %p262
      %s264 = ssub.s32 %s31, %s38
      %p265 = scmp.eq.s32.totalorder %s264, 0
      %s267 = sadd.s32 %s266, 1
      %s268 = scalar_select %p265, %s266, %s267
      %p271 = pneg %p265
      %p272 = scmp.eq.s32.totalorder %s31, 1
      %p273 = por %p271, %p272
      %p274 = scmp.ne.s32.totalorder %s266, %s269
      %p275 = scmp.eq.s32.totalorder %s31, 0
      %p276 = por %p274, %p275
      %p277 = scmp.ne.s32.totalorder %s266, %s269
      %p278 = scmp.eq.s32.totalorder %s36, 1
      %p279 = por %p277, %p278
      %p280 = scmp.ne.s32.totalorder %s269, %s270
      %p281 = scmp.eq.s32.totalorder %s36, 0
      %p282 = por %p280, %p281
      %p283 = scmp.ne.s32.totalorder %s269, %s270
      %p284 = scmp.eq.s32.totalorder %s37, 1
      %p285 = por %p283, %p284
      %p287 = scmp.ne.s32.totalorder %s270, %s286
      %p288 = scmp.eq.s32.totalorder %s37, 0
      %p289 = por %p287, %p288
      %p290 = scmp.le.s32.totalorder 1, %s31
      %p291 = scmp.lt.s32.totalorder %s31, 3
      %p292 = pnand %p290, %p291
      %p293 = pneg %p292
      // Predicated region
      $region9: #{tpu_custom_call.1} parent=5 // pred_check
        _
      $region10: #{tpu_custom_call.1} parent=5 // pred_check_branch
        %295 = sbr.rel (%p292) target = $region12
      $region11: #{tpu_custom_call.1} parent=5 // pred_region
        %s296 = ssub.s32 %s31, 1
        // Predicated region
        $region13: #{tpu_custom_call.1} parent=11 // pred_check
          %p297 = pneg %p104
        $region14: #{tpu_custom_call.1} parent=11 // pred_check_branch
          %299 = sbr.rel (%p297) target = $region16
        $region15: #{tpu_custom_call.1} parent=11 // pred_region
          %301 = vsyncadd [#allocation6], 0
          %s302 = sshll.u32 %s2, 4
          %s303 = int_to_ptr.hbm [resolvable:$true] %s302
          %s304 = sshll.u32 [#allocation7], 4
          %s305 = int_to_ptr.vmem [resolvable:$true] %s304
          %310 = dma.hbm_to_vmem [thread:$0]  %s303, 512, %s305, [#allocation6], 128, 128, 8
        $region16: #{tpu_custom_call.1} parent=11 // pred_fallthru
          _
        // Predicated region
        $region17: #{tpu_custom_call.1} parent=11 // pred_check
          %p311 = pneg %p125
        $region18: #{tpu_custom_call.1} parent=11 // pred_check_branch
          %313 = sbr.rel (%p311) target = $region20
        $region19: #{tpu_custom_call.1} parent=11 // pred_region
          %315 = vsyncadd [#allocation9], 0
          %s316 = sshll.u32 %s3, 4
          %s317 = int_to_ptr.hbm [resolvable:$true] %s316
          %s318 = sshll.u32 [#allocation8], 4
          %s319 = int_to_ptr.vmem [resolvable:$true] %s318
          %324 = dma.hbm_to_vmem [thread:$0]  %s317, 512, %s319, [#allocation9], 128, 128, 8
        $region20: #{tpu_custom_call.1} parent=11 // pred_fallthru
          _
        // Predicated region
        $region21: #{tpu_custom_call.1} parent=11 // pred_check
          %p325 = pneg %p146
        $region22: #{tpu_custom_call.1} parent=11 // pred_check_branch
          %327 = sbr.rel (%p325) target = $region24
        $region23: #{tpu_custom_call.1} parent=11 // pred_region
          %329 = vsyncadd [#allocation9], 0
          %s330 = sshll.u32 %s4, 4
          %s331 = int_to_ptr.hbm [resolvable:$true] %s330
          %s332 = sshll.u32 [#allocation10], 4
          %s333 = int_to_ptr.vmem [resolvable:$true] %s332
          %338 = dma.hbm_to_vmem [thread:$0]  %s331, 512, %s333, [#allocation9], 128, 128, 8
        $region24: #{tpu_custom_call.1} parent=11 // pred_fallthru
          _
        // Predicated region
        $region25: #{tpu_custom_call.1} parent=11 // pred_check
          %p339 = pneg %p167
        $region26: #{tpu_custom_call.1} parent=11 // pred_check_branch
          %341 = sbr.rel (%p339) target = $region28
        $region27: #{tpu_custom_call.1} parent=11 // pred_region
          %343 = vsyncadd [#allocation12], 0
          %s344 = sshll.u32 %s5, 4
          %s345 = int_to_ptr.hbm [resolvable:$true] %s344
          %s346 = sshll.u32 [#allocation11], 4
          %s347 = int_to_ptr.vmem [resolvable:$true] %s346
          %352 = dma.hbm_to_vmem [thread:$0]  %s345, 512, %s347, [#allocation12], 128, 128, 8
        $region28: #{tpu_custom_call.1} parent=11 // pred_fallthru
          _
        // Predicated region
        $region29: #{tpu_custom_call.1} parent=11 // pred_check
          %p353 = pneg %p188
        $region30: #{tpu_custom_call.1} parent=11 // pred_check_branch
          %355 = sbr.rel (%p353) target = $region32
        $region31: #{tpu_custom_call.1} parent=11 // pred_region
          _
        $region32: #{tpu_custom_call.1} parent=11 // pred_fallthru
          _
        // Predicated region
        $region33: #{tpu_custom_call.1} parent=11 // pred_check
          %p356 = pneg %p209
        $region34: #{tpu_custom_call.1} parent=11 // pred_check_branch
          %358 = sbr.rel (%p356) target = $region36
        $region35: #{tpu_custom_call.1} parent=11 // pred_region
          _
        $region36: #{tpu_custom_call.1} parent=11 // pred_fallthru
          _
        // Predicated region
        $region37: #{tpu_custom_call.1} parent=11 // pred_check
          %p359 = pneg %p230
        $region38: #{tpu_custom_call.1} parent=11 // pred_check_branch
          %361 = sbr.rel (%p359) target = $region40
        $region39: #{tpu_custom_call.1} parent=11 // pred_region
          _
        $region40: #{tpu_custom_call.1} parent=11 // pred_fallthru
          _
      $region12: #{tpu_custom_call.1} parent=5 // pred_fallthru
        _
      %p362 = scmp.lt.s32.totalorder %s31, 2
      // Predicated region
      $region41: #{tpu_custom_call.1} parent=5 // pred_check
        %p363 = pneg %p362
      $region42: #{tpu_custom_call.1} parent=5 // pred_check_branch
        %365 = sbr.rel (%p363) target = $region44
      $region43: #{tpu_custom_call.1} parent=5 // pred_region
        // Predicated region
        $region45: #{tpu_custom_call.1} parent=43 // pred_check
          %p366 = pneg %p51
        $region46: #{tpu_custom_call.1} parent=43 // pred_check_branch
          %368 = sbr.rel (%p366) target = $region48
        $region47: #{tpu_custom_call.1} parent=43 // pred_region
          %s369 = sand.u32 %s41, 1
          %s370 = scalar_lea.sflag [#allocation3], %s369
          %s371 = sand.u32 %s41, 1
          %s372 = smul.addr %s371, 8
          %s373 = scalar_lea.vmem [#allocation2], %s372
          %375 = vsyncadd %s370, 0
          %s376 = smul.addr %s31, 8
          %s377 = scalar_lea.hbm %s0, %s376
          %s379 = sshll.u32 %s377, 4
          %s380 = int_to_ptr.hbm [resolvable:$true] %s379
          %s381 = sshll.u32 %s373, 4
          %s382 = int_to_ptr.vmem [resolvable:$true] %s381
          %384 = dma.hbm_to_vmem [thread:$0]  %s380, 128, %s382, %s370
        $region48: #{tpu_custom_call.1} parent=43 // pred_fallthru
          _
        // Predicated region
        $region49: #{tpu_custom_call.1} parent=43 // pred_check
          %p385 = pneg %p77
        $region50: #{tpu_custom_call.1} parent=43 // pred_check_branch
          %387 = sbr.rel (%p385) target = $region52
        $region51: #{tpu_custom_call.1} parent=43 // pred_region
          %s388 = sand.u32 %s31, 1
          %s389 = scalar_lea.sflag [#allocation6], %s388
          %s390 = sand.u32 %s67, 1
          %s391 = smul.addr %s390, 8
          %s392 = scalar_lea.vmem [#allocation5], %s391
          %394 = vsyncadd %s389, 0
          %s395 = smul.addr %s31, 8
          %s396 = scalar_lea.hbm %s1, %s395
          %s398 = sshll.u32 %s396, 4
          %s399 = int_to_ptr.hbm [resolvable:$true] %s398
          %s400 = sshll.u32 %s392, 4
          %s401 = int_to_ptr.vmem [resolvable:$true] %s400
          %403 = dma.hbm_to_vmem [thread:$0]  %s399, 128, %s401, %s389
        $region52: #{tpu_custom_call.1} parent=43 // pred_fallthru
          _
      $region44: #{tpu_custom_call.1} parent=5 // pred_fallthru
        _
      %p404 = scmp.le.s32.totalorder 1, %s31
      %p405 = scmp.lt.s32.totalorder %s31, 3
      %p406 = pnand %p404, %p405
      %p407 = pneg %p406
      // Predicated region
      $region53: #{tpu_custom_call.1} parent=5 // pred_check
        _
      $region54: #{tpu_custom_call.1} parent=5 // pred_check_branch
        %409 = sbr.rel (%p406) target = $region56
      $region55: #{tpu_custom_call.1} parent=5 // pred_region
        %s410 = ssub.s32 %s31, 1
        %s411 = sand.u32 %s44, 1
        %s412 = scalar_lea.sflag [#allocation3], %s411
        %s413 = sand.u32 %s44, 1
        %s414 = smul.addr %s413, 8
        %s415 = scalar_lea.vmem [#allocation2], %s414
        // Predicated region
        $region57: #{tpu_custom_call.1} parent=55 // pred_check
          %p416 = pneg %p57
        $region58: #{tpu_custom_call.1} parent=55 // pred_check_branch
          %418 = sbr.rel (%p416) target = $region60
        $region59: #{tpu_custom_call.1} parent=55 // pred_region
          %420 = dma.done %s412, 128
        $region60: #{tpu_custom_call.1} parent=55 // pred_fallthru
          _
        %s421 = sand.u32 %s36, 1
        %s422 = scalar_lea.sflag [#allocation6], %s421
        %s423 = sand.u32 %s70, 1
        %s424 = smul.addr %s423, 8
        %s425 = scalar_lea.vmem [#allocation5], %s424
        // Predicated region
        $region61: #{tpu_custom_call.1} parent=55 // pred_check
          %p426 = pneg %p83
        $region62: #{tpu_custom_call.1} parent=55 // pred_check_branch
          %428 = sbr.rel (%p426) target = $region64
        $region63: #{tpu_custom_call.1} parent=55 // pred_region
          %430 = dma.done %s422, 128
        $region64: #{tpu_custom_call.1} parent=55 // pred_fallthru
          _
        // Predicated region
        $region65: #{tpu_custom_call.1} parent=55 // pred_check
          %p431 = pneg %p104
        $region66: #{tpu_custom_call.1} parent=55 // pred_check_branch
          %433 = sbr.rel (%p431) target = $region68
        $region67: #{tpu_custom_call.1} parent=55 // pred_region
          %435 = dma.done [#allocation6], 512
        $region68: #{tpu_custom_call.1} parent=55 // pred_fallthru
          _
        // Predicated region
        $region69: #{tpu_custom_call.1} parent=55 // pred_check
          %p436 = pneg %p125
        $region70: #{tpu_custom_call.1} parent=55 // pred_check_branch
          %438 = sbr.rel (%p436) target = $region72
        $region71: #{tpu_custom_call.1} parent=55 // pred_region
          %440 = dma.done [#allocation9], 512
        $region72: #{tpu_custom_call.1} parent=55 // pred_fallthru
          _
        // Predicated region
        $region73: #{tpu_custom_call.1} parent=55 // pred_check
          %p441 = pneg %p146
        $region74: #{tpu_custom_call.1} parent=55 // pred_check_branch
          %443 = sbr.rel (%p441) target = $region76
        $region75: #{tpu_custom_call.1} parent=55 // pred_region
          %445 = dma.done [#allocation9], 512
        $region76: #{tpu_custom_call.1} parent=55 // pred_fallthru
          _
        // Predicated region
        $region77: #{tpu_custom_call.1} parent=55 // pred_check
          %p446 = pneg %p167
        $region78: #{tpu_custom_call.1} parent=55 // pred_check_branch
          %448 = sbr.rel (%p446) target = $region80
        $region79: #{tpu_custom_call.1} parent=55 // pred_region
          %450 = dma.done [#allocation12], 512
        $region80: #{tpu_custom_call.1} parent=55 // pred_fallthru
          _
        %s451 = sand.u32 %s44, 1
        %s452 = scalar_lea.sflag [#allocation3], %s451
        %s453 = sand.u32 %s44, 1
        %s454 = smul.addr %s453, 8
        %s455 = scalar_lea.vmem [#allocation2], %s454
        %p456 = pneg %p57
        %p457 = pneg %p54
        %s458 = sand.u32 %s36, 1
        %s459 = scalar_lea.sflag [#allocation6], %s458
        %s460 = sand.u32 %s70, 1
        %s461 = smul.addr %s460, 8
        %s462 = scalar_lea.vmem [#allocation5], %s461
        %p463 = pneg %p83
        %p464 = pneg %p80
        %p465 = pneg %p104
        %p466 = pneg %p101
        %p467 = pneg %p125
        %p468 = pneg %p122
        %p469 = pneg %p146
        %p470 = pneg %p143
        %p471 = pneg %p167
        %p472 = pneg %p164
        %p473 = pneg %p188
        %p474 = pneg %p185
        %p475 = pneg %p209
        %p476 = pneg %p206
        %p477 = pneg %p230
        %p478 = pneg %p227
        %p479 = pneg %p256
        %p480 = pneg %p253
        %s481 = sand.u32 %s243, 1
        %s482 = scalar_lea.sflag [#allocation4], %s481
        %s483 = sand.u32 %s243, 1
        %s484 = smul.addr %s483, 8
        %s485 = scalar_lea.vmem [#allocation13], %s484
        %p486 = pneg %p282
        %p487 = pneg %p279
        %s488 = sand.u32 %s269, 1
        %s489 = scalar_lea.sflag [#allocation15], %s488
        %s490 = sand.u32 %s269, 1
        %s491 = smul.addr %s490, 32
        %s492 = scalar_lea.vmem [#allocation14], %s491
        %v493 = vld [vmem:[%s415] sm:$0xff]
        %v494 = vld [vmem:[%s425] sm:$0xff]
        %v495 = vld [vmem:[#allocation7] sm:$0xff]
        %v496 = vld [vmem:[#allocation7 + $0x8] sm:$0xff]
        %v497 = vld [vmem:[#allocation7 + $0x10] sm:$0xff]
        %v498 = vld [vmem:[#allocation7 + $0x18] sm:$0xff]
        %vm499 = vcmask 261120
        %v501 = vsel %vm499, %v493, 0
        %503 = vmatpush.msra.mxu0 0.0
        %504 = vmatpush.msra.mxu0 0.0
        %505 = vmatpush.msra.mxu0 0.0
        %506 = vmatpush.msra.mxu0 0.0
        %507 = vmatpush.msra.mxu0 0.0
        %508 = vmatpush.msra.mxu0 0.0
        %509 = vmatpush.msra.mxu0 0.0
        %510 = vmatpush.msra.mxu0 0.0
        %511 = vmatpush.msra.mxu0 0.0
        %512 = vmatpush.msra.mxu0 0.0
        %513 = vmatpush.msra.mxu0 0.0
        %514 = vmatpush.msra.mxu0 0.0
        %515 = vmatpush.msra.mxu0 %v498
        %516 = vmatpush.msra.mxu0 %v497
        %517 = vmatpush.msra.mxu0 %v496
        %518 = vmatpush.msra.mxu0 %v495
        %519 = vmatmul.f32.gmra.mxu0 %v501
        %v520 = vpop.f32.mrf.mxu0
        %v521 = vadd.f32 0.0, %v520
        %522 = vdwg.mxu0
        %v523 = vld [vmem:[#allocation8] sm:$0xff]
        %v524 = vld [vmem:[#allocation8 + $0x8] sm:$0xff]
        %v525 = vld [vmem:[#allocation8 + $0x10] sm:$0xff]
        %v526 = vld [vmem:[#allocation8 + $0x18] sm:$0xff]
        %v528 = vsel %vm499, %v494, 0
        %530 = vmatpush.msra.mxu0 0.0
        %531 = vmatpush.msra.mxu0 0.0
        %532 = vmatpush.msra.mxu0 0.0
        %533 = vmatpush.msra.mxu0 0.0
        %534 = vmatpush.msra.mxu0 0.0
        %535 = vmatpush.msra.mxu0 0.0
        %536 = vmatpush.msra.mxu0 0.0
        %537 = vmatpush.msra.mxu0 0.0
        %538 = vmatpush.msra.mxu0 0.0
        %539 = vmatpush.msra.mxu0 0.0
        %540 = vmatpush.msra.mxu0 0.0
        %541 = vmatpush.msra.mxu0 0.0
        %542 = vmatpush.msra.mxu0 %v526
        %543 = vmatpush.msra.mxu0 %v525
        %544 = vmatpush.msra.mxu0 %v524
        %545 = vmatpush.msra.mxu0 %v523
        %546 = vmatmul.f32.gmra.mxu0 %v528
        %v547 = vpop.f32.mrf.mxu0
        %v548 = vadd.f32 0.0, %v547
        %549 = vdwg.mxu0
        %v550 = vld [vmem:[#allocation10] sm:$0xff]
        %v551 = vld [vmem:[#allocation10 + $0x8] sm:$0xff]
        %v552 = vld [vmem:[#allocation10 + $0x10] sm:$0xff]
        %v553 = vld [vmem:[#allocation10 + $0x18] sm:$0xff]
        %554 = vmatpush.msra.mxu0 0.0
        %555 = vmatpush.msra.mxu0 0.0
        %556 = vmatpush.msra.mxu0 0.0
        %557 = vmatpush.msra.mxu0 0.0
        %558 = vmatpush.msra.mxu0 0.0
        %559 = vmatpush.msra.mxu0 0.0
        %560 = vmatpush.msra.mxu0 0.0
        %561 = vmatpush.msra.mxu0 0.0
        %562 = vmatpush.msra.mxu0 0.0
        %563 = vmatpush.msra.mxu0 0.0
        %564 = vmatpush.msra.mxu0 0.0
        %565 = vmatpush.msra.mxu0 0.0
        %566 = vmatpush.msra.mxu0 %v553
        %567 = vmatpush.msra.mxu0 %v552
        %568 = vmatpush.msra.mxu0 %v551
        %569 = vmatpush.msra.mxu0 %v550
        %570 = vmatmul.f32.gmra.mxu0 %v528
        %v571 = vpop.f32.mrf.mxu0
        %v572 = vadd.f32 0.0, %v571
        %573 = vdwg.mxu0
        %vm574 = vcmask 64512
        %v576 = vsel %vm574, %v521, 0
        %v579 = vsel %vm574, %v548, 0
        %581 = vmatpush.xpose.msra.mxu0 0.0
        %582 = vmatpush.xpose.msra.mxu0 0.0
        %583 = vmatpush.xpose.msra.mxu0 0.0
        %584 = vmatpush.xpose.msra.mxu0 0.0
        %585 = vmatpush.xpose.msra.mxu0 0.0
        %586 = vmatpush.xpose.msra.mxu0 0.0
        %587 = vmatpush.xpose.msra.mxu0 0.0
        %588 = vmatpush.xpose.msra.mxu0 0.0
        %589 = vmatpush.xpose.msra.mxu0 0.0
        %590 = vmatpush.xpose.msra.mxu0 0.0
        %591 = vmatpush.xpose.msra.mxu0 0.0
        %592 = vmatpush.xpose.msra.mxu0 0.0
        %593 = vmatpush.xpose.msra.mxu0 0.0
        %594 = vmatpush.xpose.msra.mxu0 0.0
        %595 = vmatpush.xpose.msra.mxu0 0.0
        %596 = vmatpush.xpose.msra.mxu0 %v579
        %597 = vmatmul.f32.gmra.mxu0 %v576
        %v598 = vpop.f32.mrf.mxu0
        %v599 = vadd.f32 0.0, %v598
        %600 = vdwg.mxu0
        %v601 = vsel %vm574, %v599, -inf
        %602 = vmax.xlane.f32.xlu0 %v601
        %v603 = vpop.xlane.xlu0 %602
        %v604 = vsub.f32 %v599, %v603
        %v605 = vmul.f32 %v604, 1.442695
        %v606 = vpow.pop %v605
        %v607 = vsel %vm574, %v606, 0.0
        %608 = vadd.xlane.f32.xlu0 %v607
        %v609 = vpop.xlane.xlu0 %608
        %v610 = vrcp.pop %v609
        %v611 = vmul.f32 %v609, %v610
        %v612 = vsub.f32 1.0, %v611
        %v613 = vmul.f32 %v610, %v612
        %v614 = vadd.f32 %v610, %v613
        %vm615 = vweird.f32 %v609
        %vm616 = vweird.f32 %v610
        %vm617 = vmor %vm615, %vm616
        %v618 = vsel %vm617, %v610, %v614
        %v619 = vand.u32 2147483647, %v609
        %vm620 = vcmp.eq.f32.partialorder %v619, 8.507059e+37
        %v621 = vand.u32 %v609, 2147483648
        %v622 = vor.u32 1.1754944e-38, %v621
        %v623 = vsel %vm620, %v622, %v618
        %v624 = vmul.f32 %v606, %v623
        %v626 = vsel %vm574, %v624, 0
        %628 = vmatpush.msra.mxu0 0.0
        %629 = vmatpush.msra.mxu0 0.0
        %630 = vmatpush.msra.mxu0 0.0
        %631 = vmatpush.msra.mxu0 0.0
        %632 = vmatpush.msra.mxu0 0.0
        %633 = vmatpush.msra.mxu0 0.0
        %634 = vmatpush.msra.mxu0 0.0
        %635 = vmatpush.msra.mxu0 0.0
        %636 = vmatpush.msra.mxu0 0.0
        %637 = vmatpush.msra.mxu0 0.0
        %638 = vmatpush.msra.mxu0 0.0
        %639 = vmatpush.msra.mxu0 0.0
        %640 = vmatpush.msra.mxu0 0.0
        %641 = vmatpush.msra.mxu0 0.0
        %642 = vmatpush.msra.mxu0 0.0
        %643 = vmatpush.msra.mxu0 %v572
        %644 = vmatmul.f32.gmra.mxu0 %v626
        %v645 = vpop.f32.mrf.mxu0
        %v646 = vadd.f32 0.0, %v645
        %647 = vdwg.mxu0
        %648 = vst.msk [vmem:[%s492] sm:$0xff] %vm574, %v624
        %649 = vrot.lane.b32.xlu0 %v521, 120
        %v650 = vpop.permute.xlu0 %649
        %651 = vrot.lane.b32.xlu0 %v548, 120
        %v652 = vpop.permute.xlu0 %651
        %v653 = vsel %vm574, %v650, 0
        %v655 = vsel %vm574, %v652, 0
        %657 = vmatpush.xpose.msra.mxu0 0.0
        %658 = vmatpush.xpose.msra.mxu0 0.0
        %659 = vmatpush.xpose.msra.mxu0 0.0
        %660 = vmatpush.xpose.msra.mxu0 0.0
        %661 = vmatpush.xpose.msra.mxu0 0.0
        %662 = vmatpush.xpose.msra.mxu0 0.0
        %663 = vmatpush.xpose.msra.mxu0 0.0
        %664 = vmatpush.xpose.msra.mxu0 0.0
        %665 = vmatpush.xpose.msra.mxu0 0.0
        %666 = vmatpush.xpose.msra.mxu0 0.0
        %667 = vmatpush.xpose.msra.mxu0 0.0
        %668 = vmatpush.xpose.msra.mxu0 0.0
        %669 = vmatpush.xpose.msra.mxu0 0.0
        %670 = vmatpush.xpose.msra.mxu0 0.0
        %671 = vmatpush.xpose.msra.mxu0 0.0
        %672 = vmatpush.xpose.msra.mxu0 %v655
        %673 = vmatmul.f32.gmra.mxu0 %v653
        %v674 = vpop.f32.mrf.mxu0
        %v675 = vadd.f32 0.0, %v674
        %676 = vdwg.mxu0
        %v677 = vsel %vm574, %v675, -inf
        %678 = vmax.xlane.f32.xlu0 %v677
        %v679 = vpop.xlane.xlu0 %678
        %v680 = vsub.f32 %v675, %v679
        %v681 = vmul.f32 %v680, 1.442695
        %v682 = vpow.pop %v681
        %v683 = vsel %vm574, %v682, 0.0
        %684 = vadd.xlane.f32.xlu0 %v683
        %v685 = vpop.xlane.xlu0 %684
        %v686 = vrcp.pop %v685
        %v687 = vmul.f32 %v685, %v686
        %v688 = vsub.f32 1.0, %v687
        %v689 = vmul.f32 %v686, %v688
        %v690 = vadd.f32 %v686, %v689
        %vm691 = vweird.f32 %v685
        %vm692 = vweird.f32 %v686
        %vm693 = vmor %vm691, %vm692
        %v694 = vsel %vm693, %v686, %v690
        %v695 = vand.u32 2147483647, %v685
        %vm696 = vcmp.eq.f32.partialorder %v695, 8.507059e+37
        %v697 = vand.u32 %v685, 2147483648
        %v698 = vor.u32 1.1754944e-38, %v697
        %v699 = vsel %vm696, %v698, %v694
        %v700 = vmul.f32 %v682, %v699
        %702 = vrot.lane.b32.xlu0 %v572, 120
        %v703 = vpop.permute.xlu0 %702
        %v706 = vsel %vm574, %v700, 0
        %708 = vmatpush.msra.mxu0 0.0
        %709 = vmatpush.msra.mxu0 0.0
        %710 = vmatpush.msra.mxu0 0.0
        %711 = vmatpush.msra.mxu0 0.0
        %712 = vmatpush.msra.mxu0 0.0
        %713 = vmatpush.msra.mxu0 0.0
        %714 = vmatpush.msra.mxu0 0.0
        %715 = vmatpush.msra.mxu0 0.0
        %716 = vmatpush.msra.mxu0 0.0
        %717 = vmatpush.msra.mxu0 0.0
        %718 = vmatpush.msra.mxu0 0.0
        %719 = vmatpush.msra.mxu0 0.0
        %720 = vmatpush.msra.mxu0 0.0
        %721 = vmatpush.msra.mxu0 0.0
        %722 = vmatpush.msra.mxu0 0.0
        %723 = vmatpush.msra.mxu0 %v703
        %724 = vmatmul.f32.gmra.mxu0 %v706
        %v725 = vpop.f32.mrf.mxu0
        %v726 = vadd.f32 0.0, %v725
        %727 = vdwg.mxu0
        %s728 = scalar_lea.vmem %s492, 8 [#allocation14]
        %729 = vst.msk [vmem:[%s728] sm:$0xff] %vm574, %v700
        %730 = vrot.lane.b32.xlu0 %v521, 112
        %v731 = vpop.permute.xlu0 %730
        %732 = vrot.lane.b32.xlu0 %v548, 112
        %v733 = vpop.permute.xlu0 %732
        %v734 = vsel %vm574, %v731, 0
        %v736 = vsel %vm574, %v733, 0
        %738 = vmatpush.xpose.msra.mxu0 0.0
        %739 = vmatpush.xpose.msra.mxu0 0.0
        %740 = vmatpush.xpose.msra.mxu0 0.0
        %741 = vmatpush.xpose.msra.mxu0 0.0
        %742 = vmatpush.xpose.msra.mxu0 0.0
        %743 = vmatpush.xpose.msra.mxu0 0.0
        %744 = vmatpush.xpose.msra.mxu0 0.0
        %745 = vmatpush.xpose.msra.mxu0 0.0
        %746 = vmatpush.xpose.msra.mxu0 0.0
        %747 = vmatpush.xpose.msra.mxu0 0.0
        %748 = vmatpush.xpose.msra.mxu0 0.0
        %749 = vmatpush.xpose.msra.mxu0 0.0
        %750 = vmatpush.xpose.msra.mxu0 0.0
        %751 = vmatpush.xpose.msra.mxu0 0.0
        %752 = vmatpush.xpose.msra.mxu0 0.0
        %753 = vmatpush.xpose.msra.mxu0 %v736
        %754 = vmatmul.f32.gmra.mxu0 %v734
        %v755 = vpop.f32.mrf.mxu0
        %v756 = vadd.f32 0.0, %v755
        %757 = vdwg.mxu0
        %v758 = vsel %vm574, %v756, -inf
        %759 = vmax.xlane.f32.xlu0 %v758
        %v760 = vpop.xlane.xlu0 %759
        %v761 = vsub.f32 %v756, %v760
        %v762 = vmul.f32 %v761, 1.442695
        %v763 = vpow.pop %v762
        %v764 = vsel %vm574, %v763, 0.0
        %765 = vadd.xlane.f32.xlu0 %v764
        %v766 = vpop.xlane.xlu0 %765
        %v767 = vrcp.pop %v766
        %v768 = vmul.f32 %v766, %v767
        %v769 = vsub.f32 1.0, %v768
        %v770 = vmul.f32 %v767, %v769
        %v771 = vadd.f32 %v767, %v770
        %vm772 = vweird.f32 %v766
        %vm773 = vweird.f32 %v767
        %vm774 = vmor %vm772, %vm773
        %v775 = vsel %vm774, %v767, %v771
        %v776 = vand.u32 2147483647, %v766
        %vm777 = vcmp.eq.f32.partialorder %v776, 8.507059e+37
        %v778 = vand.u32 %v766, 2147483648
        %v779 = vor.u32 1.1754944e-38, %v778
        %v780 = vsel %vm777, %v779, %v775
        %v781 = vmul.f32 %v763, %v780
        %782 = vrot.lane.b32.xlu0 %v572, 112
        %v783 = vpop.permute.xlu0 %782
        %v786 = vsel %vm574, %v781, 0
        %788 = vmatpush.msra.mxu0 0.0
        %789 = vmatpush.msra.mxu0 0.0
        %790 = vmatpush.msra.mxu0 0.0
        %791 = vmatpush.msra.mxu0 0.0
        %792 = vmatpush.msra.mxu0 0.0
        %793 = vmatpush.msra.mxu0 0.0
        %794 = vmatpush.msra.mxu0 0.0
        %795 = vmatpush.msra.mxu0 0.0
        %796 = vmatpush.msra.mxu0 0.0
        %797 = vmatpush.msra.mxu0 0.0
        %798 = vmatpush.msra.mxu0 0.0
        %799 = vmatpush.msra.mxu0 0.0
        %800 = vmatpush.msra.mxu0 0.0
        %801 = vmatpush.msra.mxu0 0.0
        %802 = vmatpush.msra.mxu0 0.0
        %803 = vmatpush.msra.mxu0 %v783
        %804 = vmatmul.f32.gmra.mxu0 %v786
        %v805 = vpop.f32.mrf.mxu0
        %v806 = vadd.f32 0.0, %v805
        %807 = vdwg.mxu0
        %s808 = scalar_lea.vmem %s492, 16 [#allocation14]
        %809 = vst.msk [vmem:[%s808] sm:$0xff] %vm574, %v781
        %810 = vrot.lane.b32.xlu0 %v521, 104
        %v811 = vpop.permute.xlu0 %810
        %812 = vrot.lane.b32.xlu0 %v548, 104
        %v813 = vpop.permute.xlu0 %812
        %v814 = vsel %vm574, %v811, 0
        %v816 = vsel %vm574, %v813, 0
        %818 = vmatpush.xpose.msra.mxu0 0.0
        %819 = vmatpush.xpose.msra.mxu0 0.0
        %820 = vmatpush.xpose.msra.mxu0 0.0
        %821 = vmatpush.xpose.msra.mxu0 0.0
        %822 = vmatpush.xpose.msra.mxu0 0.0
        %823 = vmatpush.xpose.msra.mxu0 0.0
        %824 = vmatpush.xpose.msra.mxu0 0.0
        %825 = vmatpush.xpose.msra.mxu0 0.0
        %826 = vmatpush.xpose.msra.mxu0 0.0
        %827 = vmatpush.xpose.msra.mxu0 0.0
        %828 = vmatpush.xpose.msra.mxu0 0.0
        %829 = vmatpush.xpose.msra.mxu0 0.0
        %830 = vmatpush.xpose.msra.mxu0 0.0
        %831 = vmatpush.xpose.msra.mxu0 0.0
        %832 = vmatpush.xpose.msra.mxu0 0.0
        %833 = vmatpush.xpose.msra.mxu0 %v816
        %834 = vmatmul.f32.gmra.mxu0 %v814
        %v835 = vpop.f32.mrf.mxu0
        %v836 = vadd.f32 0.0, %v835
        %837 = vdwg.mxu0
        %v838 = vsel %vm574, %v836, -inf
        %839 = vmax.xlane.f32.xlu0 %v838
        %v840 = vpop.xlane.xlu0 %839
        %v841 = vsub.f32 %v836, %v840
        %v842 = vmul.f32 %v841, 1.442695
        %v843 = vpow.pop %v842
        %v844 = vsel %vm574, %v843, 0.0
        %845 = vadd.xlane.f32.xlu0 %v844
        %v846 = vpop.xlane.xlu0 %845
        %v847 = vrcp.pop %v846
        %v848 = vmul.f32 %v846, %v847
        %v849 = vsub.f32 1.0, %v848
        %v850 = vmul.f32 %v847, %v849
        %v851 = vadd.f32 %v847, %v850
        %vm852 = vweird.f32 %v846
        %vm853 = vweird.f32 %v847
        %vm854 = vmor %vm852, %vm853
        %v855 = vsel %vm854, %v847, %v851
        %v856 = vand.u32 2147483647, %v846
        %vm857 = vcmp.eq.f32.partialorder %v856, 8.507059e+37
        %v858 = vand.u32 %v846, 2147483648
        %v859 = vor.u32 1.1754944e-38, %v858
        %v860 = vsel %vm857, %v859, %v855
        %v861 = vmul.f32 %v843, %v860
        %862 = vrot.lane.b32.xlu0 %v572, 104
        %v863 = vpop.permute.xlu0 %862
        %v866 = vsel %vm574, %v861, 0
        %868 = vmatpush.msra.mxu0 0.0
        %869 = vmatpush.msra.mxu0 0.0
        %870 = vmatpush.msra.mxu0 0.0
        %871 = vmatpush.msra.mxu0 0.0
        %872 = vmatpush.msra.mxu0 0.0
        %873 = vmatpush.msra.mxu0 0.0
        %874 = vmatpush.msra.mxu0 0.0
        %875 = vmatpush.msra.mxu0 0.0
        %876 = vmatpush.msra.mxu0 0.0
        %877 = vmatpush.msra.mxu0 0.0
        %878 = vmatpush.msra.mxu0 0.0
        %879 = vmatpush.msra.mxu0 0.0
        %880 = vmatpush.msra.mxu0 0.0
        %881 = vmatpush.msra.mxu0 0.0
        %882 = vmatpush.msra.mxu0 0.0
        %883 = vmatpush.msra.mxu0 %v863
        %884 = vmatmul.f32.gmra.mxu0 %v866
        %v885 = vpop.f32.mrf.mxu0
        %v886 = vadd.f32 0.0, %v885
        %887 = vdwg.mxu0
        %s888 = scalar_lea.vmem %s492, 24 [#allocation14]
        %889 = vst.msk [vmem:[%s888] sm:$0xff] %vm574, %v861
        %891 = vrot.lane.b32.xlu0 %v726, 8
        %v892 = vpop.permute.xlu0 %891
        %895 = vrot.lane.b32.xlu0 %v806, 16
        %v896 = vpop.permute.xlu0 %895
        %899 = vrot.lane.b32.xlu0 %v886, 24
        %v900 = vpop.permute.xlu0 %899
        %v902 = vsel %vm574, %v646, %v892
        %vm903 = vcmask 130048
        %v904 = vsel %vm903, %v902, %v896
        %vm905 = vcmask 195584
        %v906 = vsel %vm905, %v904, %v900
        %v907 = vld [vmem:[#allocation11] sm:$0xff]
        %v908 = vld [vmem:[#allocation11 + $0x8] sm:$0xff]
        %v909 = vld [vmem:[#allocation11 + $0x10] sm:$0xff]
        %v910 = vld [vmem:[#allocation11 + $0x18] sm:$0xff]
        %v911 = vld [vmem:[%s6] sm:$0x1]
        %v913 = vperm.slane %v911, 0
        %v916 = vsel %vm499, %v906, 0
        %918 = vmatpush.msra.mxu0 0.0
        %919 = vmatpush.msra.mxu0 0.0
        %920 = vmatpush.msra.mxu0 0.0
        %921 = vmatpush.msra.mxu0 0.0
        %922 = vmatpush.msra.mxu0 0.0
        %923 = vmatpush.msra.mxu0 0.0
        %924 = vmatpush.msra.mxu0 0.0
        %925 = vmatpush.msra.mxu0 0.0
        %926 = vmatpush.msra.mxu0 0.0
        %927 = vmatpush.msra.mxu0 0.0
        %928 = vmatpush.msra.mxu0 0.0
        %929 = vmatpush.msra.mxu0 0.0
        %930 = vmatpush.msra.mxu0 %v910
        %931 = vmatpush.msra.mxu0 %v909
        %932 = vmatpush.msra.mxu0 %v908
        %933 = vmatpush.msra.mxu0 %v907
        %934 = vmatmul.f32.gmra.mxu0 %v916
        %v935 = vpop.f32.mrf.mxu0
        %v936 = vadd.f32 %v913, %v935
        %937 = vdwg.mxu0
        %v938 = vadd.f32 %v936, %v493
        %v939 = vsel %vm499, %v938, 0.0
        %940 = vadd.xlane.f32.xlu0 %v939
        %v941 = vpop.xlane.xlu0 %940
        %v942 = vrcp.pop 32.0
        %v943 = vmul.f32 32.0, %v942
        %v944 = vsub.f32 1.0, %v943
        %v945 = vmul.f32 %v942, %v944
        %v946 = vadd.f32 %v942, %v945
        %vm947 = vweird.f32 %v942
        %v948 = vsel %vm947, %v942, %v946
        %v949 = vmul.f32 %v941, %v948
        %v950 = vsub.f32 %v938, %v949
        %v951 = vmul.f32 %v950, %v950
        %v952 = vsel %vm499, %v951, 0.0
        %953 = vadd.xlane.f32.xlu0 %v952
        %v954 = vpop.xlane.xlu0 %953
        %v955 = vmul.f32 %v954, %v948
        %v956 = vadd.f32 %v955, 1e-06
        %v957 = vrsqrt.pop %v956
        %v958 = vmul.f32 %v957, %v956
        %v959 = vmul.f32 %v958, %v957
        %v960 = vmul.f32 0.5, %v959
        %v961 = vsub.f32 1.5, %v960
        %v962 = vmul.f32 %v957, %v961
        %vm963 = vweird.f32 %v956
        %vm964 = vweird.f32 %v957
        %vm965 = vmor %vm963, %vm964
        %v966 = vsel %vm965, %v957, %v962
        %v967 = vmul.f32 %v950, %v966
        %v968 = vld [vmem:[%s7] sm:$0x1]
        %v970 = vperm.slane %v968, 0
        %v972 = vmul.f32 %v967, %v970
        %v973 = vld [vmem:[%s8] sm:$0x1]
        %v975 = vperm.slane %v973, 0
        %v977 = vadd.f32 %v972, %v975
        %978 = vst.msk [vmem:[%s485] sm:$0xff] %vm499, %v977
        %s979 = sand.u32 %s243, 1
        %s980 = scalar_lea.sflag [#allocation4], %s979
        %s981 = sand.u32 %s243, 1
        %s982 = smul.addr %s981, 8
        %s983 = scalar_lea.vmem [#allocation13], %s982
        %s984 = sand.u32 %s269, 1
        %s985 = scalar_lea.sflag [#allocation15], %s984
        %s986 = sand.u32 %s269, 1
        %s987 = smul.addr %s986, 32
        %s988 = scalar_lea.vmem [#allocation14], %s987
        // Predicated region
        $region81: #{tpu_custom_call.1} parent=55 // pred_check
          %p989 = pneg %p253
        $region82: #{tpu_custom_call.1} parent=55 // pred_check_branch
          %991 = sbr.rel (%p989) target = $region84
        $region83: #{tpu_custom_call.1} parent=55 // pred_region
          %993 = vsyncadd %s980, 0
          %s994 = smul.addr %s36, 8
          %s995 = scalar_lea.hbm %s9, %s994
          %s997 = sshll.u32 %s983, 4
          %s998 = int_to_ptr.vmem [resolvable:$true] %s997
          %s999 = sshll.u32 %s995, 4
          %s1000 = int_to_ptr.hbm [resolvable:$true] %s999
          %1002 = dma.vmem_to_hbm [thread:$0]  %s998, 128, %s1000, %s980
        $region84: #{tpu_custom_call.1} parent=55 // pred_fallthru
          _
        // Predicated region
        $region85: #{tpu_custom_call.1} parent=55 // pred_check
          %p1003 = pneg %p279
        $region86: #{tpu_custom_call.1} parent=55 // pred_check_branch
          %1005 = sbr.rel (%p1003) target = $region88
        $region87: #{tpu_custom_call.1} parent=55 // pred_region
          %1007 = vsyncadd %s985, 0
          %s1008 = smul.addr %s36, 8
          %s1009 = scalar_lea.hbm %s10, %s1008
          %s1010 = sshll.u32 %s988, 4
          %s1011 = int_to_ptr.vmem [resolvable:$true] %s1010
          %s1012 = sshll.u32 %s1009, 4
          %s1013 = int_to_ptr.hbm [resolvable:$true] %s1012
          %1018 = dma.vmem_to_hbm [thread:$0]  %s1011, 512, %s1013, %s985, 128, 256, 8
        $region88: #{tpu_custom_call.1} parent=55 // pred_fallthru
          _
      $region56: #{tpu_custom_call.1} parent=5 // pred_fallthru
        _
      %p1019 = scmp.le.s32.totalorder 2, %s31
      // Predicated region
      $region89: #{tpu_custom_call.1} parent=5 // pred_check
        %p1020 = pneg %p1019
      $region90: #{tpu_custom_call.1} parent=5 // pred_check_branch
        %1022 = sbr.rel (%p1020) target = $region92
      $region91: #{tpu_custom_call.1} parent=5 // pred_region
        %s1023 = ssub.s32 %s31, 2
        // Predicated region
        $region93: #{tpu_custom_call.1} parent=91 // pred_check
          %p1024 = pneg %p259
        $region94: #{tpu_custom_call.1} parent=91 // pred_check_branch
          %1026 = sbr.rel (%p1024) target = $region96
        $region95: #{tpu_custom_call.1} parent=91 // pred_region
          %s1027 = sand.u32 %s244, 1
          %s1028 = scalar_lea.sflag [#allocation4], %s1027
          %s1029 = sand.u32 %s244, 1
          %s1030 = smul.addr %s1029, 8
          %s1031 = scalar_lea.vmem [#allocation13], %s1030
          %1033 = dma.done %s1028, 128
        $region96: #{tpu_custom_call.1} parent=91 // pred_fallthru
          _
        // Predicated region
        $region97: #{tpu_custom_call.1} parent=91 // pred_check
          %p1034 = pneg %p285
        $region98: #{tpu_custom_call.1} parent=91 // pred_check_branch
          %1036 = sbr.rel (%p1034) target = $region100
        $region99: #{tpu_custom_call.1} parent=91 // pred_region
          %s1037 = sand.u32 %s270, 1
          %s1038 = scalar_lea.sflag [#allocation15], %s1037
          %s1039 = sand.u32 %s270, 1
          %s1040 = smul.addr %s1039, 32
          %s1041 = scalar_lea.vmem [#allocation14], %s1040
          %1043 = dma.done %s1038, 512
        $region100: #{tpu_custom_call.1} parent=91 // pred_fallthru
          _
      $region92: #{tpu_custom_call.1} parent=5 // pred_fallthru
        _
    $region6: #{tpu_custom_call.1} parent=1 // loop_footer
      %s35 = sadd.s32 1, %s31
    $region7: #{tpu_custom_call.1} parent=1 // loop_footer_branch
      %30 = sbr.rel target = $region3
    $region8: #{tpu_custom_call.1} parent=1 // loop_exit
      _
    %1044 = vsyncpa [#allocation3], 1
    %s1045 = scalar_lea.sflag [#allocation3], 1
    %1046 = vsyncpa %s1045, 1
    %1047 = vsyncpa [#allocation6], 1
    %s1048 = scalar_lea.sflag [#allocation6], 1
    %1049 = vsyncpa %s1048, 1
    %1050 = vsyncpa [#allocation9], 1
    %1051 = vsyncpa [#allocation12], 1
    %1052 = vsyncpa [#allocation4], 1
    %s1053 = scalar_lea.sflag [#allocation4], 1
    %1054 = vsyncpa %s1053, 1
    %1055 = vsyncpa [#allocation15], 1
    %s1056 = scalar_lea.sflag [#allocation15], 1
    %1057 = vsyncpa %s1056, 1

</llo_original>
